<compile_context>
chip_gen: v7x
topology: tpu7x:2x2x1
jax: 0.10.0
libtpu: 0.0.40
codegen_flags: <defaults>
</compile_context>

<pallas_src>
import functools

import jax
import jax.numpy as jnp
from jax.experimental import pallas as pl
from jax.experimental.pallas import tpu as pltpu

HIDDEN = 256        # OracleNetwork hidden width
LANE = 128          # TPU lane width
SUBLANE_BF16 = 16   # bf16 sublane packing


def _round_up(n, m):
    return ((n + m - 1) // m) * m


def _bf16_elementwise_supported():
    # v6e / v7x have bf16 VPU+EUP; v5e and older do not -> keep f32 tanh there.
    try:
        kind = jax.devices()[0].device_kind.lower()
    except Exception:
        return False
    return ("v6" in kind) or ("v7" in kind)


_BF16_ACT = _bf16_elementwise_supported()


def oracle_mlp_kernel(x_ref, w1_ref, b1_ref, w2_ref, b2_ref, w3_ref, b3_ref,
                      o_ref, *, bf16_act):
    # Matmuls: bf16 operands, f32 accumulation on the MXU.
    # Bias add in f32; tanh in bf16 on chips with a bf16 EUP (v6e/v7x),
    # otherwise f32 tanh followed by a bf16 cast for the next matmul (v5e).
    x = x_ref[...]                                  # already bf16 (wrapper cast)
    a1 = jnp.dot(x, w1_ref[...], preferred_element_type=jnp.float32) + b1_ref[...]
    h1 = (jnp.tanh(a1.astype(jnp.bfloat16)) if bf16_act
          else jnp.tanh(a1).astype(jnp.bfloat16))
    a2 = jnp.dot(h1, w2_ref[...], preferred_element_type=jnp.float32) + b2_ref[...]
    h2 = (jnp.tanh(a2.astype(jnp.bfloat16)) if bf16_act
          else jnp.tanh(a2).astype(jnp.bfloat16))
    o_ref[...] = (jnp.dot(h2, w3_ref[...], preferred_element_type=jnp.float32)
                  + b3_ref[...]).astype(o_ref.dtype)


def prepare_params(params, input_features, outputs):
    """Pad to lane multiples (zeros -> exact same math) and cast weights to bf16.

    Do this once; the prepared params can be reused across many forward calls.
    """
    w1, b1, w2, b2, w3, b3 = params
    f_pad = _round_up(input_features, LANE)
    o_pad = _round_up(outputs, LANE)
    w1p = jnp.zeros((f_pad, HIDDEN), jnp.float32).at[:input_features, :].set(w1)
    w3p = jnp.zeros((HIDDEN, o_pad), jnp.float32).at[:, :outputs].set(w3)
    b3p = jnp.zeros((1, o_pad), jnp.float32).at[:, :outputs].set(b3)
    return (w1p.astype(jnp.bfloat16), b1,
            w2.astype(jnp.bfloat16), b2,
            w3p.astype(jnp.bfloat16), b3p)


def _batch_tiling(batch):
    """Return (padded_batch, tile_rows)."""
    if batch <= 512:
        # Small-batch fast path: single block, rows padded only to the bf16
        # sublane multiple (block == full array dims, so (8,128) rule is met).
        b_pad = _round_up(batch, SUBLANE_BF16)
        return b_pad, b_pad
    b_pad = _round_up(batch, 256)
    # Prefer big tiles (amortize ~0.35us/step overhead) while keeping >= 2 grid
    # steps so v7x's two TensorCores both get work under "parallel" semantics.
    for t in (1024, 512, 256):
        if b_pad % t == 0 and b_pad // t >= 2:
            return b_pad, t
    return b_pad, 256


@functools.partial(jax.jit, static_argnames=("outputs",))
def oracle_forward(x, prepared, outputs):
    """x: (B, input_features) float32 -> (B, outputs) float32."""
    w1, b1, w2, b2, w3, b3 = prepared
    B, F = x.shape
    f_pad = w1.shape[0]
    o_pad = w3.shape[1]
    b_pad, tile_b = _batch_tiling(B)

    # Fused pad + cast: x is streamed into the kernel as bf16 (halves x DMA).
    xb = x.astype(jnp.bfloat16)
    if (b_pad, f_pad) == (B, F):
        xp = xb                                       # already aligned: no pad pass
    else:
        xp = jnp.zeros((b_pad, f_pad), jnp.bfloat16).at[:B, :F].set(xb)

    grid = (b_pad // tile_b,)

    flops = 2 * b_pad * (f_pad * HIDDEN + HIDDEN * HIDDEN + HIDDEN * o_pad)
    transcendentals = 2 * b_pad * HIDDEN
    bytes_accessed = (b_pad * f_pad * 2                      # bf16 x
                      + (w1.size + w2.size + w3.size) * 2    # bf16 weights
                      + (b1.size + b2.size + b3.size) * 4    # f32 biases
                      + b_pad * o_pad * 4)                   # f32 output

    # Weights/biases: constant block index every grid step -> loaded once,
    # VMEM-resident across all batch tiles.
    const = lambda shape: pl.BlockSpec(shape, lambda i: (0, 0))

    out_padded = pl.pallas_call(
        functools.partial(oracle_mlp_kernel, bf16_act=_BF16_ACT),
        out_shape=jax.ShapeDtypeStruct((b_pad, o_pad), jnp.float32),
        grid=grid,
        in_specs=[
            pl.BlockSpec((tile_b, f_pad), lambda i: (i, 0)),   # x tile
            const(w1.shape), const(b1.shape),
            const(w2.shape), const(b2.shape),
            const(w3.shape), const(b3.shape),
        ],
        out_specs=pl.BlockSpec((tile_b, o_pad), lambda i: (i, 0)),
        compiler_params=pltpu.CompilerParams(
            dimension_semantics=("parallel",)),
        cost_estimate=pl.CostEstimate(
            flops=flops,
            transcendentals=transcendentals,
            bytes_accessed=bytes_accessed),
    )(xp, w1, b1, w2, b2, w3, b3)

    if (b_pad, o_pad) == (B, outputs):
        return out_padded
    return out_padded[:B, :outputs]


def init_params(key, input_features, outputs):
    """Deterministic init matching nn.Linear's U(-1/sqrt(fan_in), 1/sqrt(fan_in)).

    Weights returned transposed to (in, out) for the kernel's x @ W layout.
    Biases kept 2D (1, out) for TPU layout.
    """
    def linear(k, fan_in, fan_out):
        kw, kb = jax.random.split(k)
        bound = 1.0 / jnp.sqrt(jnp.float32(fan_in))
        w = jax.random.uniform(kw, (fan_in, fan_out), jnp.float32,
                               minval=-bound, maxval=bound)
        b = jax.random.uniform(kb, (1, fan_out), jnp.float32,
                               minval=-bound, maxval=bound)
        return w, b

    k1, k2, k3 = jax.random.split(key, 3)
    w1, b1 = linear(k1, input_features, HIDDEN)
    w2, b2 = linear(k2, HIDDEN, HIDDEN)
    w3, b3 = linear(k3, HIDDEN, outputs)
    return (w1, b1, w2, b2, w3, b3)


def oracle_forward_ref(x, params):
    """Pure-JAX f32 reference of the PyTorch forward pass."""
    w1, b1, w2, b2, w3, b3 = params
    h = jnp.tanh(x @ w1 + b1)
    h = jnp.tanh(h @ w2 + b2)
    return h @ w3 + b3


if __name__ == "__main__":
    input_features = 64
    outputs = 16

    key = jax.random.PRNGKey(0)
    kx, kp, kx2 = jax.random.split(key, 3)
    params = init_params(kp, input_features, outputs)
    prepared = prepare_params(params, input_features, outputs)

    # Small-batch fast path (single block, rows padded to 16).
    batch = 8
    x = jax.random.normal(kx, (batch, input_features), jnp.float32)
    y = oracle_forward(x, prepared, outputs)
    jax.block_until_ready(y)
    y_ref = oracle_forward_ref(x, params)
    assert y.shape == (batch, outputs)
    # bf16 matmul operands / bf16 tanh (f32 accumulate) -> bf16-class tolerance.
    assert jnp.allclose(y, y_ref, atol=5e-2, rtol=5e-2), (
        float(jnp.max(jnp.abs(y - y_ref))))

    # Large-batch tiled path (exercises the multi-step "parallel" grid).
    batch2 = 1536
    x2 = jax.random.normal(kx2, (batch2, input_features), jnp.float32)
    y2 = oracle_forward(x2, prepared, outputs)
    jax.block_until_ready(y2)
    y2_ref = oracle_forward_ref(x2, params)
    assert y2.shape == (batch2, outputs)
    assert jnp.allclose(y2, y2_ref, atol=5e-2, rtol=5e-2), (
        float(jnp.max(jnp.abs(y2 - y2_ref))))

    print("KERNEL_OK")
</pallas_src>

<mosaic_0001>
module attributes {stable_mosaic.version = 11 : i64} {
  func.func @oracle_mlp_kernel(%arg0: i32, %arg1: memref<16x128xbf16, #tpu.memory_space<vmem>>, %arg2: memref<128x256xbf16, #tpu.memory_space<vmem>>, %arg3: memref<1x256xf32, #tpu.memory_space<vmem>>, %arg4: memref<256x256xbf16, #tpu.memory_space<vmem>>, %arg5: memref<1x256xf32, #tpu.memory_space<vmem>>, %arg6: memref<256x128xbf16, #tpu.memory_space<vmem>>, %arg7: memref<1x128xf32, #tpu.memory_space<vmem>>, %arg8: memref<16x128xf32, #tpu.memory_space<vmem>>) attributes {dimension_semantics = [#tpu.dimension_semantics<parallel>], iteration_bounds = array<i64: 1>, scalar_prefetch = 0 : i64, scratch_operands = 0 : i64, tpu.core_type = #tpu.core_type<tc>, window_params = [{transform_indices = @transform_0, window_bounds = array<i64: 16, 128>}, {pipeline_mode = #tpu.pipeline_mode<synchronous>, transform_indices = @transform_1, window_bounds = array<i64: 128, 256>}, {pipeline_mode = #tpu.pipeline_mode<synchronous>, transform_indices = @transform_2, window_bounds = array<i64: 1, 256>}, {pipeline_mode = #tpu.pipeline_mode<synchronous>, transform_indices = @transform_3, window_bounds = array<i64: 256, 256>}, {pipeline_mode = #tpu.pipeline_mode<synchronous>, transform_indices = @transform_4, window_bounds = array<i64: 1, 256>}, {pipeline_mode = #tpu.pipeline_mode<synchronous>, transform_indices = @transform_5, window_bounds = array<i64: 256, 128>}, {pipeline_mode = #tpu.pipeline_mode<synchronous>, transform_indices = @transform_6, window_bounds = array<i64: 1, 128>}, {transform_indices = @transform_7, window_bounds = array<i64: 16, 128>}]} {
    %c0 = arith.constant 0 : index
    %c0_0 = arith.constant 0 : index
    %0 = vector.load %arg1[%c0, %c0_0] : memref<16x128xbf16, #tpu.memory_space<vmem>>, vector<16x128xbf16>
    %c0_1 = arith.constant 0 : index
    %c0_2 = arith.constant 0 : index
    %1 = vector.load %arg2[%c0_1, %c0_2] : memref<128x256xbf16, #tpu.memory_space<vmem>>, vector<128x256xbf16>
    %cst = arith.constant dense<0.000000e+00> : vector<16x256xf32>
    %2 = tpu.matmul %0, %1, %cst {dimension_numbers = #tpu.dot_dimension_numbers<[1], [0], [0], [1], [0, 0, 1, 1], [], []>} : vector<16x128xbf16>, vector<128x256xbf16>, vector<16x256xf32> -> vector<16x256xf32>
    %c0_3 = arith.constant 0 : index
    %c0_4 = arith.constant 0 : index
    %3 = vector.load %arg3[%c0_3, %c0_4] : memref<1x256xf32, #tpu.memory_space<vmem>>, vector<1x256xf32>
    %4 = vector.broadcast %3 : vector<1x256xf32> to vector<16x256xf32>
    %5 = arith.addf %2, %4 : vector<16x256xf32>
    %6 = math.tanh %5 : vector<16x256xf32>
    %7 = arith.truncf %6 : vector<16x256xf32> to vector<16x256xbf16>
    %c0_5 = arith.constant 0 : index
    %c0_6 = arith.constant 0 : index
    %8 = vector.load %arg4[%c0_5, %c0_6] : memref<256x256xbf16, #tpu.memory_space<vmem>>, vector<256x256xbf16>
    %cst_7 = arith.constant dense<0.000000e+00> : vector<16x256xf32>
    %9 = tpu.matmul %7, %8, %cst_7 {dimension_numbers = #tpu.dot_dimension_numbers<[1], [0], [0], [1], [0, 0, 1, 1], [], []>} : vector<16x256xbf16>, vector<256x256xbf16>, vector<16x256xf32> -> vector<16x256xf32>
    %c0_8 = arith.constant 0 : index
    %c0_9 = arith.constant 0 : index
    %10 = vector.load %arg5[%c0_8, %c0_9] : memref<1x256xf32, #tpu.memory_space<vmem>>, vector<1x256xf32>
    %11 = vector.broadcast %10 : vector<1x256xf32> to vector<16x256xf32>
    %12 = arith.addf %9, %11 : vector<16x256xf32>
    %13 = math.tanh %12 : vector<16x256xf32>
    %14 = arith.truncf %13 : vector<16x256xf32> to vector<16x256xbf16>
    %c0_10 = arith.constant 0 : index
    %c0_11 = arith.constant 0 : index
    %15 = vector.load %arg6[%c0_10, %c0_11] : memref<256x128xbf16, #tpu.memory_space<vmem>>, vector<256x128xbf16>
    %cst_12 = arith.constant dense<0.000000e+00> : vector<16x128xf32>
    %16 = tpu.matmul %14, %15, %cst_12 {dimension_numbers = #tpu.dot_dimension_numbers<[1], [0], [0], [1], [0, 0, 1, 1], [], []>} : vector<16x256xbf16>, vector<256x128xbf16>, vector<16x128xf32> -> vector<16x128xf32>
    %c0_13 = arith.constant 0 : index
    %c0_14 = arith.constant 0 : index
    %17 = vector.load %arg7[%c0_13, %c0_14] : memref<1x128xf32, #tpu.memory_space<vmem>>, vector<1x128xf32>
    %18 = vector.broadcast %17 : vector<1x128xf32> to vector<16x128xf32>
    %19 = arith.addf %16, %18 : vector<16x128xf32>
    %c0_15 = arith.constant 0 : index
    %c0_16 = arith.constant 0 : index
    %20 = vector.load %arg8[%c0_15, %c0_16] : memref<16x128xf32, #tpu.memory_space<vmem>>, vector<16x128xf32>
    tpu.vector_store %arg8[%c0_15, %c0_16], %19 {strides = array<i32>} : memref<16x128xf32, #tpu.memory_space<vmem>>, vector<16x128xf32>,
    return
  }
  func.func @transform_0(%arg0: i32) -> (i32, i32) {
    %c0_i32 = arith.constant 0 : i32
    %c0_i32_0 = arith.constant 0 : i32
    return %arg0, %c0_i32 : i32, i32
  }
  func.func @transform_1(%arg0: i32) -> (i32, i32) {
    %c0_i32 = arith.constant 0 : i32
    %c0_i32_0 = arith.constant 0 : i32
    %c0_i32_1 = arith.constant 0 : i32
    return %c0_i32, %c0_i32_0 : i32, i32
  }
  func.func @transform_2(%arg0: i32) -> (i32, i32) {
    %c0_i32 = arith.constant 0 : i32
    %c0_i32_0 = arith.constant 0 : i32
    %c0_i32_1 = arith.constant 0 : i32
    return %c0_i32, %c0_i32_0 : i32, i32
  }
  func.func @transform_3(%arg0: i32) -> (i32, i32) {
    %c0_i32 = arith.constant 0 : i32
    %c0_i32_0 = arith.constant 0 : i32
    %c0_i32_1 = arith.constant 0 : i32
    return %c0_i32, %c0_i32_0 : i32, i32
  }
  func.func @transform_4(%arg0: i32) -> (i32, i32) {
    %c0_i32 = arith.constant 0 : i32
    %c0_i32_0 = arith.constant 0 : i32
    %c0_i32_1 = arith.constant 0 : i32
    return %c0_i32, %c0_i32_0 : i32, i32
  }
  func.func @transform_5(%arg0: i32) -> (i32, i32) {
    %c0_i32 = arith.constant 0 : i32
    %c0_i32_0 = arith.constant 0 : i32
    %c0_i32_1 = arith.constant 0 : i32
    return %c0_i32, %c0_i32_0 : i32, i32
  }
  func.func @transform_6(%arg0: i32) -> (i32, i32) {
    %c0_i32 = arith.constant 0 : i32
    %c0_i32_0 = arith.constant 0 : i32
    %c0_i32_1 = arith.constant 0 : i32
    return %c0_i32, %c0_i32_0 : i32, i32
  }
  func.func @transform_7(%arg0: i32) -> (i32, i32) {
    %c0_i32 = arith.constant 0 : i32
    %c0_i32_0 = arith.constant 0 : i32
    return %arg0, %c0_i32 : i32, i32
  }
}

</mosaic_0001>

<llo_original>
// kernel: oracle_forward.1
$region0: #{oracle_forward.1}
  #allocation0 [shape = 'u32[]', space=smem, size = 0x4, offset = 0x4, fixed_abs, tag = 'smem constant byte address 0x4 - core index']
  #allocation1 [shape = 'u32[144,128]{1,0:T(1,128)}', space=vmem, size = 0x12000, scoped, tag = 'internal scratch']
  %s0 = inlined_call_operand.vmem [shape: bf16[16,128], index: 0, kind: input, shape index: {}]
  %s1 = inlined_call_operand.hbm [shape: bf16[128,256], index: 1, kind: input, shape index: {}]
  %s2 = inlined_call_operand.vmem [shape: f32[1,256], index: 2, kind: input, shape index: {}]
  %s3 = inlined_call_operand.hbm [shape: bf16[256,256], index: 3, kind: input, shape index: {}]
  %s4 = inlined_call_operand.vmem [shape: f32[1,256], index: 4, kind: input, shape index: {}]
  %s5 = inlined_call_operand.hbm [shape: bf16[256,128], index: 5, kind: input, shape index: {}]
  %s6 = inlined_call_operand.vmem [shape: f32[1,128], index: 6, kind: input, shape index: {}]
  %s7 = inlined_call_operand.vmem [shape: f32[16,128], index: 7, kind: output, shape index: {}]
  %s8 = sld [smem:[#allocation0]]
  $region50: #{oracle_forward.1} parent=0
    _
  %s10 = ssub.s32 1, %s8
  %s11 = scalar_select 0, %s10, %s8
  $region1: #{oracle_forward.1} parent=0
    #allocation2 [shape = 'u8[65536]{0}', space=vmem, size = 0x10000, scoped, tag = 'input window, operand 1, single buffered']
    #allocation3 [shape = 's32[1]{0}', space=sflag, size = 0x4, scoped, tag = 'scoped memory for oracle_forward.1']
    #allocation4 [shape = 'u8[131072]{0}', space=vmem, size = 0x20000, scoped, tag = 'input window, operand 3, single buffered']
    #allocation5 [shape = 's32[1]{0}', space=sflag, size = 0x4, scoped, tag = 'scoped memory for oracle_forward.1']
    #allocation6 [shape = 'u8[65536]{0}', space=vmem, size = 0x10000, scoped, tag = 'input window, operand 5, single buffered']
    %12 = vsyncpa [#allocation3], 0
    %13 = vsyncpa [#allocation5], 0
    // Predicated region
    $region2: #{oracle_forward.1} parent=1 // pred_check
      _
    $region3: #{oracle_forward.1} parent=1 // pred_check_branch
      %15 = sbr.rel (0) target = $region5
    $region4: #{oracle_forward.1} parent=1 // pred_region
      _
    $region5: #{oracle_forward.1} parent=1 // pred_fallthru
      _
    // Predicated region
    $region6: #{oracle_forward.1} parent=1 // pred_check
      _
    $region7: #{oracle_forward.1} parent=1 // pred_check_branch
      %17 = sbr.rel (0) target = $region9
    $region8: #{oracle_forward.1} parent=1 // pred_region
      %s19 = ssub.s32 2048, 2048
      %20 = vsyncadd [#allocation3], %s19
      %s21 = sshll.u32 [#allocation2], 4
      %s22 = int_to_ptr.vmem [resolvable:$true] %s21
      %27 = dma.hbm_to_vmem [thread:$0]  %s1, 2048, %s22, [#allocation3], 128, 128, 8
    $region9: #{oracle_forward.1} parent=1 // pred_fallthru
      _
    // Predicated region
    $region10: #{oracle_forward.1} parent=1 // pred_check
      _
    $region11: #{oracle_forward.1} parent=1 // pred_check_branch
      %29 = sbr.rel (0) target = $region13
    $region12: #{oracle_forward.1} parent=1 // pred_region
      _
    $region13: #{oracle_forward.1} parent=1 // pred_fallthru
      _
    // Predicated region
    $region14: #{oracle_forward.1} parent=1 // pred_check
      _
    $region15: #{oracle_forward.1} parent=1 // pred_check_branch
      %31 = sbr.rel (0) target = $region17
    $region16: #{oracle_forward.1} parent=1 // pred_region
      %s33 = ssub.s32 4096, 4096
      %34 = vsyncadd [#allocation5], %s33
      %s35 = sshll.u32 [#allocation4], 4
      %s36 = int_to_ptr.vmem [resolvable:$true] %s35
      %41 = dma.hbm_to_vmem [thread:$0]  %s3, 4096, %s36, [#allocation5], 128, 128, 8
    $region17: #{oracle_forward.1} parent=1 // pred_fallthru
      _
    // Predicated region
    $region18: #{oracle_forward.1} parent=1 // pred_check
      _
    $region19: #{oracle_forward.1} parent=1 // pred_check_branch
      %43 = sbr.rel (0) target = $region21
    $region20: #{oracle_forward.1} parent=1 // pred_region
      _
    $region21: #{oracle_forward.1} parent=1 // pred_fallthru
      _
    // Predicated region
    $region22: #{oracle_forward.1} parent=1 // pred_check
      _
    $region23: #{oracle_forward.1} parent=1 // pred_check_branch
      %45 = sbr.rel (0) target = $region25
    $region24: #{oracle_forward.1} parent=1 // pred_region
      %s47 = ssub.s32 2048, 2048
      %48 = vsyncadd [#allocation5], %s47
      %s49 = sshll.u32 [#allocation6], 4
      %s50 = int_to_ptr.vmem [resolvable:$true] %s49
      %55 = dma.hbm_to_vmem [thread:$0]  %s5, 2048, %s50, [#allocation5], 64, 64, 4
    $region25: #{oracle_forward.1} parent=1 // pred_fallthru
      _
    // Predicated region
    $region26: #{oracle_forward.1} parent=1 // pred_check
      _
    $region27: #{oracle_forward.1} parent=1 // pred_check_branch
      %57 = sbr.rel (0) target = $region29
    $region28: #{oracle_forward.1} parent=1 // pred_region
      _
    $region29: #{oracle_forward.1} parent=1 // pred_fallthru
      _
    // Predicated region
    $region30: #{oracle_forward.1} parent=1 // pred_check
      _
    $region31: #{oracle_forward.1} parent=1 // pred_check_branch
      %59 = sbr.rel (0) target = $region33
    $region32: #{oracle_forward.1} parent=1 // pred_region
      %60 = dma.done [#allocation3], 2048
    $region33: #{oracle_forward.1} parent=1 // pred_fallthru
      _
    // Predicated region
    $region34: #{oracle_forward.1} parent=1 // pred_check
      _
    $region35: #{oracle_forward.1} parent=1 // pred_check_branch
      %62 = sbr.rel (0) target = $region37
    $region36: #{oracle_forward.1} parent=1 // pred_region
      %63 = dma.done [#allocation5], 4096
    $region37: #{oracle_forward.1} parent=1 // pred_fallthru
      _
    // Predicated region
    $region38: #{oracle_forward.1} parent=1 // pred_check
      _
    $region39: #{oracle_forward.1} parent=1 // pred_check_branch
      %65 = sbr.rel (0) target = $region41
    $region40: #{oracle_forward.1} parent=1 // pred_region
      %66 = dma.done [#allocation5], 2048
    $region41: #{oracle_forward.1} parent=1 // pred_fallthru
      _
    %v68 = vld [vmem:[%s0] sm:$0xf]
    %v69 = vld [vmem:[%s0 + $0x4] sm:$0xf]
    %v70 = vld [vmem:[#allocation2] sm:$0xff]
    %v71 = vld [vmem:[#allocation2 + $0x8] sm:$0xff]
    %v72 = vld [vmem:[#allocation2 + $0x10] sm:$0xff]
    %v73 = vld [vmem:[#allocation2 + $0x18] sm:$0xff]
    %v74 = vld [vmem:[#allocation2 + $0x20] sm:$0xff]
    %v75 = vld [vmem:[#allocation2 + $0x28] sm:$0xff]
    %v76 = vld [vmem:[#allocation2 + $0x30] sm:$0xff]
    %v77 = vld [vmem:[#allocation2 + $0x38] sm:$0xff]
    %v78 = vld [vmem:[#allocation2 + $0x40] sm:$0xff]
    %v79 = vld [vmem:[#allocation2 + $0x48] sm:$0xff]
    %v80 = vld [vmem:[#allocation2 + $0x50] sm:$0xff]
    %v81 = vld [vmem:[#allocation2 + $0x58] sm:$0xff]
    %v82 = vld [vmem:[#allocation2 + $0x60] sm:$0xff]
    %v83 = vld [vmem:[#allocation2 + $0x68] sm:$0xff]
    %v84 = vld [vmem:[#allocation2 + $0x70] sm:$0xff]
    %v85 = vld [vmem:[#allocation2 + $0x78] sm:$0xff]
    %v86 = vld [vmem:[%s2] sm:$0x3]
    %v88 = vlaneseq
    %v89 = vshrl.u32 %v88, 7
    %v90 = vsub.s32 0, %v89
    %v91 = vrot.slane %v86, %v90
    %v92 = vlaneseq
    %v93 = vshrl.u32 %v92, 7
    %v94 = vsub.s32 1, %v93
    %v95 = vrot.slane %v86, %v94
    %v100 = vunpack.c.l.b16 %v68
    %v101 = vunpack.c.l.b16 %v69
    %v102 = vpack.c.b16 %v101, %v100
    %v120 = vunpack.c.l.b16 %v70
    %v121 = vunpack.c.h.b16 %v70
    %v122 = vunpack.c.l.b16 %v71
    %v123 = vunpack.c.h.b16 %v71
    %v124 = vunpack.c.l.b16 %v72
    %v125 = vunpack.c.h.b16 %v72
    %v126 = vunpack.c.l.b16 %v73
    %v127 = vunpack.c.h.b16 %v73
    %v128 = vunpack.c.l.b16 %v74
    %v129 = vunpack.c.h.b16 %v74
    %v130 = vunpack.c.l.b16 %v75
    %v131 = vunpack.c.h.b16 %v75
    %v132 = vunpack.c.l.b16 %v76
    %v133 = vunpack.c.h.b16 %v76
    %v134 = vunpack.c.l.b16 %v77
    %v135 = vunpack.c.h.b16 %v77
    %v136 = vunpack.c.l.b16 %v78
    %v137 = vunpack.c.h.b16 %v78
    %v138 = vunpack.c.l.b16 %v79
    %v139 = vunpack.c.h.b16 %v79
    %v140 = vunpack.c.l.b16 %v80
    %v141 = vunpack.c.h.b16 %v80
    %v142 = vunpack.c.l.b16 %v81
    %v143 = vunpack.c.h.b16 %v81
    %v144 = vunpack.c.l.b16 %v82
    %v145 = vunpack.c.h.b16 %v82
    %v146 = vunpack.c.l.b16 %v83
    %v147 = vunpack.c.h.b16 %v83
    %v148 = vunpack.c.l.b16 %v84
    %v149 = vunpack.c.h.b16 %v84
    %v150 = vunpack.c.l.b16 %v85
    %v151 = vunpack.c.h.b16 %v85
    %v152 = vpack.c.b16 %v122, %v120
    %v153 = vpack.c.b16 %v123, %v121
    %v154 = vpack.c.b16 %v126, %v124
    %v155 = vpack.c.b16 %v127, %v125
    %v156 = vpack.c.b16 %v130, %v128
    %v157 = vpack.c.b16 %v131, %v129
    %v158 = vpack.c.b16 %v134, %v132
    %v159 = vpack.c.b16 %v135, %v133
    %v160 = vpack.c.b16 %v138, %v136
    %v161 = vpack.c.b16 %v139, %v137
    %v162 = vpack.c.b16 %v142, %v140
    %v163 = vpack.c.b16 %v143, %v141
    %v164 = vpack.c.b16 %v146, %v144
    %v165 = vpack.c.b16 %v147, %v145
    %v166 = vpack.c.b16 %v150, %v148
    %v167 = vpack.c.b16 %v151, %v149
    %184 = vmatprep.subr.bf16.mxu0 %v153
    %185 = vmatpush1.bf16.msra.mxu0 %v152
    %186 = vmatprep.subr.bf16.mxu0 %v155
    %187 = vmatpush1.bf16.msra.mxu0 %v154
    %188 = vmatprep.subr.bf16.mxu0 %v157
    %189 = vmatpush1.bf16.msra.mxu0 %v156
    %190 = vmatprep.subr.bf16.mxu0 %v159
    %191 = vmatpush1.bf16.msra.mxu0 %v158
    %192 = vmatprep.subr.bf16.mxu0 %v161
    %193 = vmatpush1.bf16.msra.mxu0 %v160
    %194 = vmatprep.subr.bf16.mxu0 %v163
    %195 = vmatpush1.bf16.msra.mxu0 %v162
    %196 = vmatprep.subr.bf16.mxu0 %v165
    %197 = vmatpush1.bf16.msra.mxu0 %v164
    %198 = vmatprep.subr.bf16.mxu0 %v167
    %199 = vmatpush1.bf16.msra.mxu0 %v166
    %200 = vmatprep.subr.bf16.mxu0 0
    %201 = vmatpush1.bf16.msra.mxu0 0
    %202 = vmatprep.subr.bf16.mxu0 0
    %203 = vmatpush1.bf16.msra.mxu0 0
    %204 = vmatprep.subr.bf16.mxu0 0
    %205 = vmatpush1.bf16.msra.mxu0 0
    %206 = vmatprep.subr.bf16.mxu0 0
    %207 = vmatpush1.bf16.msra.mxu0 0
    %208 = vmatprep.subr.bf16.mxu0 0
    %209 = vmatpush1.bf16.msra.mxu0 0
    %210 = vmatprep.subr.bf16.mxu0 0
    %211 = vmatpush1.bf16.msra.mxu0 0
    %212 = vmatprep.subr.bf16.mxu0 0
    %213 = vmatpush1.bf16.msra.mxu0 0
    %214 = vmatprep.subr.bf16.mxu0 0
    %215 = vmatpush1.bf16.msra.mxu0 0
    %216 = vmatprep.mubr.bf16.mxu0 0
    %217 = vmatmul.mubr.bf16.gmra.mrb[0].mxu0 %v102
    %v218 = vpop.f32.mrb[0].mxu0
    %v219 = vadd.f32 %v91, %v218
    %v220 = vpop.f32.mrb[0].mxu0
    %v221 = vadd.f32 %v95, %v220
    %v222 = vpop.f32.mrb[0].mxu0
    %v223 = vadd.f32 %v91, %v222
    %v224 = vpop.f32.mrb[0].mxu0
    %v225 = vadd.f32 %v95, %v224
    %226 = vdwg.mxu0
    %v227 = vtanh.pop %v219
    %v228 = vtanh.pop %v221
    %v229 = vtanh.pop %v223
    %v230 = vtanh.pop %v225
    %v231 = vpack.c.bf16 %v229, %v227
    %v232 = vpack.c.bf16 %v230, %v228
    %v233 = vld [vmem:[#allocation4] sm:$0xff]
    %v234 = vld [vmem:[#allocation4 + $0x8] sm:$0xff]
    %v235 = vld [vmem:[#allocation4 + $0x10] sm:$0xff]
    %v236 = vld [vmem:[#allocation4 + $0x18] sm:$0xff]
    %v237 = vld [vmem:[#allocation4 + $0x20] sm:$0xff]
    %v238 = vld [vmem:[#allocation4 + $0x28] sm:$0xff]
    %v239 = vld [vmem:[#allocation4 + $0x30] sm:$0xff]
    %v240 = vld [vmem:[#allocation4 + $0x38] sm:$0xff]
    %v241 = vld [vmem:[#allocation4 + $0x40] sm:$0xff]
    %v242 = vld [vmem:[#allocation4 + $0x48] sm:$0xff]
    %v243 = vld [vmem:[#allocation4 + $0x50] sm:$0xff]
    %v244 = vld [vmem:[#allocation4 + $0x58] sm:$0xff]
    %v245 = vld [vmem:[#allocation4 + $0x60] sm:$0xff]
    %v246 = vld [vmem:[#allocation4 + $0x68] sm:$0xff]
    %v247 = vld [vmem:[#allocation4 + $0x70] sm:$0xff]
    %v248 = vld [vmem:[#allocation4 + $0x78] sm:$0xff]
    %v249 = vld [vmem:[#allocation4 + $0x80] sm:$0xff]
    %v250 = vld [vmem:[#allocation4 + $0x88] sm:$0xff]
    %v251 = vld [vmem:[#allocation4 + $0x90] sm:$0xff]
    %v252 = vld [vmem:[#allocation4 + $0x98] sm:$0xff]
    %v253 = vld [vmem:[#allocation4 + $0xa0] sm:$0xff]
    %v254 = vld [vmem:[#allocation4 + $0xa8] sm:$0xff]
    %v255 = vld [vmem:[#allocation4 + $0xb0] sm:$0xff]
    %v256 = vld [vmem:[#allocation4 + $0xb8] sm:$0xff]
    %v257 = vld [vmem:[#allocation4 + $0xc0] sm:$0xff]
    %v258 = vld [vmem:[#allocation4 + $0xc8] sm:$0xff]
    %v259 = vld [vmem:[#allocation4 + $0xd0] sm:$0xff]
    %v260 = vld [vmem:[#allocation4 + $0xd8] sm:$0xff]
    %v261 = vld [vmem:[#allocation4 + $0xe0] sm:$0xff]
    %v262 = vld [vmem:[#allocation4 + $0xe8] sm:$0xff]
    %v263 = vld [vmem:[#allocation4 + $0xf0] sm:$0xff]
    %v264 = vld [vmem:[#allocation4 + $0xf8] sm:$0xff]
    %v265 = vld [vmem:[%s4] sm:$0x3]
    %v267 = vlaneseq
    %v268 = vshrl.u32 %v267, 7
    %v269 = vsub.s32 0, %v268
    %v270 = vrot.slane %v265, %v269
    %v271 = vlaneseq
    %v272 = vshrl.u32 %v271, 7
    %v273 = vsub.s32 1, %v272
    %v274 = vrot.slane %v265, %v273
    %v309 = vunpack.c.l.b16 %v233
    %v310 = vunpack.c.h.b16 %v233
    %v311 = vunpack.c.l.b16 %v234
    %v312 = vunpack.c.h.b16 %v234
    %v313 = vunpack.c.l.b16 %v235
    %v314 = vunpack.c.h.b16 %v235
    %v315 = vunpack.c.l.b16 %v236
    %v316 = vunpack.c.h.b16 %v236
    %v317 = vunpack.c.l.b16 %v237
    %v318 = vunpack.c.h.b16 %v237
    %v319 = vunpack.c.l.b16 %v238
    %v320 = vunpack.c.h.b16 %v238
    %v321 = vunpack.c.l.b16 %v239
    %v322 = vunpack.c.h.b16 %v239
    %v323 = vunpack.c.l.b16 %v240
    %v324 = vunpack.c.h.b16 %v240
    %v325 = vunpack.c.l.b16 %v241
    %v326 = vunpack.c.h.b16 %v241
    %v327 = vunpack.c.l.b16 %v242
    %v328 = vunpack.c.h.b16 %v242
    %v329 = vunpack.c.l.b16 %v243
    %v330 = vunpack.c.h.b16 %v243
    %v331 = vunpack.c.l.b16 %v244
    %v332 = vunpack.c.h.b16 %v244
    %v333 = vunpack.c.l.b16 %v245
    %v334 = vunpack.c.h.b16 %v245
    %v335 = vunpack.c.l.b16 %v246
    %v336 = vunpack.c.h.b16 %v246
    %v337 = vunpack.c.l.b16 %v247
    %v338 = vunpack.c.h.b16 %v247
    %v339 = vunpack.c.l.b16 %v248
    %v340 = vunpack.c.h.b16 %v248
    %v341 = vunpack.c.l.b16 %v249
    %v342 = vunpack.c.h.b16 %v249
    %v343 = vunpack.c.l.b16 %v250
    %v344 = vunpack.c.h.b16 %v250
    %v345 = vunpack.c.l.b16 %v251
    %v346 = vunpack.c.h.b16 %v251
    %v347 = vunpack.c.l.b16 %v252
    %v348 = vunpack.c.h.b16 %v252
    %v349 = vunpack.c.l.b16 %v253
    %v350 = vunpack.c.h.b16 %v253
    %v351 = vunpack.c.l.b16 %v254
    %v352 = vunpack.c.h.b16 %v254
    %v353 = vunpack.c.l.b16 %v255
    %v354 = vunpack.c.h.b16 %v255
    %v355 = vunpack.c.l.b16 %v256
    %v356 = vunpack.c.h.b16 %v256
    %v357 = vunpack.c.l.b16 %v257
    %v358 = vunpack.c.h.b16 %v257
    %v359 = vunpack.c.l.b16 %v258
    %v360 = vunpack.c.h.b16 %v258
    %v361 = vunpack.c.l.b16 %v259
    %v362 = vunpack.c.h.b16 %v259
    %v363 = vunpack.c.l.b16 %v260
    %v364 = vunpack.c.h.b16 %v260
    %v365 = vunpack.c.l.b16 %v261
    %v366 = vunpack.c.h.b16 %v261
    %v367 = vunpack.c.l.b16 %v262
    %v368 = vunpack.c.h.b16 %v262
    %v369 = vunpack.c.l.b16 %v263
    %v370 = vunpack.c.h.b16 %v263
    %v371 = vunpack.c.l.b16 %v264
    %v372 = vunpack.c.h.b16 %v264
    %v373 = vpack.c.b16 %v311, %v309
    %v374 = vpack.c.b16 %v312, %v310
    %v375 = vpack.c.b16 %v315, %v313
    %v376 = vpack.c.b16 %v316, %v314
    %v377 = vpack.c.b16 %v319, %v317
    %v378 = vpack.c.b16 %v320, %v318
    %v379 = vpack.c.b16 %v323, %v321
    %v380 = vpack.c.b16 %v324, %v322
    %v381 = vpack.c.b16 %v327, %v325
    %v382 = vpack.c.b16 %v328, %v326
    %v383 = vpack.c.b16 %v331, %v329
    %v384 = vpack.c.b16 %v332, %v330
    %v385 = vpack.c.b16 %v335, %v333
    %v386 = vpack.c.b16 %v336, %v334
    %v387 = vpack.c.b16 %v339, %v337
    %v388 = vpack.c.b16 %v340, %v338
    %v389 = vpack.c.b16 %v343, %v341
    %v390 = vpack.c.b16 %v344, %v342
    %v391 = vpack.c.b16 %v347, %v345
    %v392 = vpack.c.b16 %v348, %v346
    %v393 = vpack.c.b16 %v351, %v349
    %v394 = vpack.c.b16 %v352, %v350
    %v395 = vpack.c.b16 %v355, %v353
    %v396 = vpack.c.b16 %v356, %v354
    %v397 = vpack.c.b16 %v359, %v357
    %v398 = vpack.c.b16 %v360, %v358
    %v399 = vpack.c.b16 %v363, %v361
    %v400 = vpack.c.b16 %v364, %v362
    %v401 = vpack.c.b16 %v367, %v365
    %v402 = vpack.c.b16 %v368, %v366
    %v403 = vpack.c.b16 %v371, %v369
    %v404 = vpack.c.b16 %v372, %v370
    %437 = vmatprep.subr.bf16.mxu0 %v374
    %438 = vmatpush1.bf16.msra.mxu0 %v373
    %439 = vmatprep.subr.bf16.mxu0 %v376
    %440 = vmatpush1.bf16.msra.mxu0 %v375
    %441 = vmatprep.subr.bf16.mxu0 %v378
    %442 = vmatpush1.bf16.msra.mxu0 %v377
    %443 = vmatprep.subr.bf16.mxu0 %v380
    %444 = vmatpush1.bf16.msra.mxu0 %v379
    %445 = vmatprep.subr.bf16.mxu0 %v382
    %446 = vmatpush1.bf16.msra.mxu0 %v381
    %447 = vmatprep.subr.bf16.mxu0 %v384
    %448 = vmatpush1.bf16.msra.mxu0 %v383
    %449 = vmatprep.subr.bf16.mxu0 %v386
    %450 = vmatpush1.bf16.msra.mxu0 %v385
    %451 = vmatprep.subr.bf16.mxu0 %v388
    %452 = vmatpush1.bf16.msra.mxu0 %v387
    %453 = vmatprep.subr.bf16.mxu0 %v390
    %454 = vmatpush1.bf16.msra.mxu0 %v389
    %455 = vmatprep.subr.bf16.mxu0 %v392
    %456 = vmatpush1.bf16.msra.mxu0 %v391
    %457 = vmatprep.subr.bf16.mxu0 %v394
    %458 = vmatpush1.bf16.msra.mxu0 %v393
    %459 = vmatprep.subr.bf16.mxu0 %v396
    %460 = vmatpush1.bf16.msra.mxu0 %v395
    %461 = vmatprep.subr.bf16.mxu0 %v398
    %462 = vmatpush1.bf16.msra.mxu0 %v397
    %463 = vmatprep.subr.bf16.mxu0 %v400
    %464 = vmatpush1.bf16.msra.mxu0 %v399
    %465 = vmatprep.subr.bf16.mxu0 %v402
    %466 = vmatpush1.bf16.msra.mxu0 %v401
    %467 = vmatprep.subr.bf16.mxu0 %v404
    %468 = vmatpush1.bf16.msra.mxu0 %v403
    %469 = vmatprep.mubr.bf16.mxu0 %v232
    %470 = vmatmul.mubr.bf16.gmra.mrb[0].mxu0 %v231
    %v471 = vpop.f32.mrb[0].mxu0
    %v472 = vadd.f32 %v270, %v471
    %v473 = vpop.f32.mrb[0].mxu0
    %v474 = vadd.f32 %v274, %v473
    %v475 = vpop.f32.mrb[0].mxu0
    %v476 = vadd.f32 %v270, %v475
    %v477 = vpop.f32.mrb[0].mxu0
    %v478 = vadd.f32 %v274, %v477
    %479 = vdwg.mxu0
    %v480 = vtanh.pop %v472
    %v481 = vtanh.pop %v474
    %v482 = vtanh.pop %v476
    %v483 = vtanh.pop %v478
    %v484 = vpack.c.bf16 %v482, %v480
    %v485 = vpack.c.bf16 %v483, %v481
    %v486 = vld [vmem:[#allocation6] sm:$0xf]
    %v487 = vld [vmem:[#allocation6 + $0x4] sm:$0xf]
    %v488 = vld [vmem:[#allocation6 + $0x8] sm:$0xf]
    %v489 = vld [vmem:[#allocation6 + $0xc] sm:$0xf]
    %v490 = vld [vmem:[#allocation6 + $0x10] sm:$0xf]
    %v491 = vld [vmem:[#allocation6 + $0x14] sm:$0xf]
    %v492 = vld [vmem:[#allocation6 + $0x18] sm:$0xf]
    %v493 = vld [vmem:[#allocation6 + $0x1c] sm:$0xf]
    %v494 = vld [vmem:[#allocation6 + $0x20] sm:$0xf]
    %v495 = vld [vmem:[#allocation6 + $0x24] sm:$0xf]
    %v496 = vld [vmem:[#allocation6 + $0x28] sm:$0xf]
    %v497 = vld [vmem:[#allocation6 + $0x2c] sm:$0xf]
    %v498 = vld [vmem:[#allocation6 + $0x30] sm:$0xf]
    %v499 = vld [vmem:[#allocation6 + $0x34] sm:$0xf]
    %v500 = vld [vmem:[#allocation6 + $0x38] sm:$0xf]
    %v501 = vld [vmem:[#allocation6 + $0x3c] sm:$0xf]
    %v502 = vld [vmem:[#allocation6 + $0x40] sm:$0xf]
    %v503 = vld [vmem:[#allocation6 + $0x44] sm:$0xf]
    %v504 = vld [vmem:[#allocation6 + $0x48] sm:$0xf]
    %v505 = vld [vmem:[#allocation6 + $0x4c] sm:$0xf]
    %v506 = vld [vmem:[#allocation6 + $0x50] sm:$0xf]
    %v507 = vld [vmem:[#allocation6 + $0x54] sm:$0xf]
    %v508 = vld [vmem:[#allocation6 + $0x58] sm:$0xf]
    %v509 = vld [vmem:[#allocation6 + $0x5c] sm:$0xf]
    %v510 = vld [vmem:[#allocation6 + $0x60] sm:$0xf]
    %v511 = vld [vmem:[#allocation6 + $0x64] sm:$0xf]
    %v512 = vld [vmem:[#allocation6 + $0x68] sm:$0xf]
    %v513 = vld [vmem:[#allocation6 + $0x6c] sm:$0xf]
    %v514 = vld [vmem:[#allocation6 + $0x70] sm:$0xf]
    %v515 = vld [vmem:[#allocation6 + $0x74] sm:$0xf]
    %v516 = vld [vmem:[#allocation6 + $0x78] sm:$0xf]
    %v517 = vld [vmem:[#allocation6 + $0x7c] sm:$0xf]
    %v518 = vld [vmem:[%s6] sm:$0x1]
    %v520 = vlaneseq
    %v521 = vshrl.u32 %v520, 7
    %v522 = vsub.s32 0, %v521
    %v523 = vrot.slane %v518, %v522
    %v557 = vunpack.c.l.b16 %v486
    %v558 = vunpack.c.l.b16 %v487
    %v559 = vunpack.c.l.b16 %v488
    %v560 = vunpack.c.l.b16 %v489
    %v561 = vunpack.c.l.b16 %v490
    %v562 = vunpack.c.l.b16 %v491
    %v563 = vunpack.c.l.b16 %v492
    %v564 = vunpack.c.l.b16 %v493
    %v565 = vunpack.c.l.b16 %v494
    %v566 = vunpack.c.l.b16 %v495
    %v567 = vunpack.c.l.b16 %v496
    %v568 = vunpack.c.l.b16 %v497
    %v569 = vunpack.c.l.b16 %v498
    %v570 = vunpack.c.l.b16 %v499
    %v571 = vunpack.c.l.b16 %v500
    %v572 = vunpack.c.l.b16 %v501
    %v573 = vunpack.c.l.b16 %v502
    %v574 = vunpack.c.l.b16 %v503
    %v575 = vunpack.c.l.b16 %v504
    %v576 = vunpack.c.l.b16 %v505
    %v577 = vunpack.c.l.b16 %v506
    %v578 = vunpack.c.l.b16 %v507
    %v579 = vunpack.c.l.b16 %v508
    %v580 = vunpack.c.l.b16 %v509
    %v581 = vunpack.c.l.b16 %v510
    %v582 = vunpack.c.l.b16 %v511
    %v583 = vunpack.c.l.b16 %v512
    %v584 = vunpack.c.l.b16 %v513
    %v585 = vunpack.c.l.b16 %v514
    %v586 = vunpack.c.l.b16 %v515
    %v587 = vunpack.c.l.b16 %v516
    %v588 = vunpack.c.l.b16 %v517
    %v589 = vpack.c.b16 %v558, %v557
    %v590 = vpack.c.b16 %v560, %v559
    %v591 = vpack.c.b16 %v562, %v561
    %v592 = vpack.c.b16 %v564, %v563
    %v593 = vpack.c.b16 %v566, %v565
    %v594 = vpack.c.b16 %v568, %v567
    %v595 = vpack.c.b16 %v570, %v569
    %v596 = vpack.c.b16 %v572, %v571
    %v597 = vpack.c.b16 %v574, %v573
    %v598 = vpack.c.b16 %v576, %v575
    %v599 = vpack.c.b16 %v578, %v577
    %v600 = vpack.c.b16 %v580, %v579
    %v601 = vpack.c.b16 %v582, %v581
    %v602 = vpack.c.b16 %v584, %v583
    %v603 = vpack.c.b16 %v586, %v585
    %v604 = vpack.c.b16 %v588, %v587
    %621 = vmatprep.subr.bf16.mxu0 0
    %622 = vmatpush1.bf16.msra.mxu0 %v589
    %623 = vmatprep.subr.bf16.mxu0 0
    %624 = vmatpush1.bf16.msra.mxu0 %v590
    %625 = vmatprep.subr.bf16.mxu0 0
    %626 = vmatpush1.bf16.msra.mxu0 %v591
    %627 = vmatprep.subr.bf16.mxu0 0
    %628 = vmatpush1.bf16.msra.mxu0 %v592
    %629 = vmatprep.subr.bf16.mxu0 0
    %630 = vmatpush1.bf16.msra.mxu0 %v593
    %631 = vmatprep.subr.bf16.mxu0 0
    %632 = vmatpush1.bf16.msra.mxu0 %v594
    %633 = vmatprep.subr.bf16.mxu0 0
    %634 = vmatpush1.bf16.msra.mxu0 %v595
    %635 = vmatprep.subr.bf16.mxu0 0
    %636 = vmatpush1.bf16.msra.mxu0 %v596
    %637 = vmatprep.subr.bf16.mxu0 0
    %638 = vmatpush1.bf16.msra.mxu0 %v597
    %639 = vmatprep.subr.bf16.mxu0 0
    %640 = vmatpush1.bf16.msra.mxu0 %v598
    %641 = vmatprep.subr.bf16.mxu0 0
    %642 = vmatpush1.bf16.msra.mxu0 %v599
    %643 = vmatprep.subr.bf16.mxu0 0
    %644 = vmatpush1.bf16.msra.mxu0 %v600
    %645 = vmatprep.subr.bf16.mxu0 0
    %646 = vmatpush1.bf16.msra.mxu0 %v601
    %647 = vmatprep.subr.bf16.mxu0 0
    %648 = vmatpush1.bf16.msra.mxu0 %v602
    %649 = vmatprep.subr.bf16.mxu0 0
    %650 = vmatpush1.bf16.msra.mxu0 %v603
    %651 = vmatprep.subr.bf16.mxu0 0
    %652 = vmatpush1.bf16.msra.mxu0 %v604
    %653 = vmatprep.mubr.bf16.mxu0 %v485
    %654 = vmatmul.mubr.bf16.gmra.mrb[0].mxu0 %v484
    %v655 = vpop.f32.mrb[0].mxu0
    %v656 = vadd.f32 %v523, %v655
    %v657 = vpop.f32.mrb[0].mxu0
    %v658 = vpop.f32.mrb[0].mxu0
    %v659 = vadd.f32 %v523, %v658
    %v660 = vpop.f32.mrb[0].mxu0
    %661 = vdwg.mxu0
    %662 = vst [vmem:[%s7] sm:$0xff] %v656
    %663 = vst [vmem:[%s7 + $0x8] sm:$0xff] %v659
    // Predicated region
    $region42: #{oracle_forward.1} parent=1 // pred_check
      _
    $region43: #{oracle_forward.1} parent=1 // pred_check_branch
      %665 = sbr.rel (0) target = $region45
    $region44: #{oracle_forward.1} parent=1 // pred_region
      _
    $region45: #{oracle_forward.1} parent=1 // pred_fallthru
      _
    // Predicated region
    $region46: #{oracle_forward.1} parent=1 // pred_check
      _
    $region47: #{oracle_forward.1} parent=1 // pred_check_branch
      %667 = sbr.rel (0) target = $region49
    $region48: #{oracle_forward.1} parent=1 // pred_region
      _
    $region49: #{oracle_forward.1} parent=1 // pred_fallthru
      _
    %668 = vsyncpa [#allocation3], 1
    %669 = vsyncpa [#allocation5], 1

</llo_original>
